<compile_context>
chip_gen: v7x
topology: tpu7x:2x2x1
jax: 0.10.0
libtpu: 0.0.40
codegen_flags: <defaults>
</compile_context>

<pallas_src>
import functools

import jax
import jax.numpy as jnp
from jax.experimental import pallas as pl
from jax.experimental.pallas import tpu as pltpu


def _transit_kernel(x_ref, w_ref, bias_ref, o_ref):
    """One (batch, row-tile) grid step of conv3x3 + folded-BN + ReLU.

    x_ref:    (1, Hp_pad, W*Cin)        H-padded input rows of one image (bf16);
                                        lanes carry the (w, ci) pairs densely.
    w_ref:    (3, W*Cin, WoCout_pad)    per-ky block-Toeplitz conv matrices
                                        (bf16); kx taps, channel mixing, BN
                                        scale, W zero-padding and lane padding
                                        are already folded in.
    bias_ref: (1, WoCout_pad)           folded BN bias (f32), zero in pad lanes.
    o_ref:    (1, TH, WoCout_pad)       output row tile, lane-dense store.
    """
    th = o_ref.shape[1]
    wcout = o_ref.shape[2]
    row0 = pl.multiple_of(pl.program_id(1) * th, th)

    # Single dynamic (sublane-offset) load of the TH+2-row halo slab; the three
    # ky taps below are static slices of this value.
    slab = x_ref[0, pl.ds(row0, th + 2), :]                  # (TH+2, W*Cin)

    acc = jnp.zeros((th, wcout), jnp.float32)
    # 3 lane-dense MXU passes (K = W*Cin, N = WoCout_pad) instead of 9 K=Cin ones.
    for ky in range(3):
        acc = acc + jnp.dot(slab[ky:ky + th, :], w_ref[ky],
                            preferred_element_type=jnp.float32)

    # Fused BN bias + ReLU epilogue, kept in f32 (v5e-friendly), lane-dense store.
    o_ref[0] = jnp.maximum(acc + bias_ref[...], 0.0).astype(o_ref.dtype)


def _pick_row_tile(ho, cap=256):
    """Largest divisor of `ho` up to `cap` that is a multiple of 16 (bf16
    sublane packing), falling back to a multiple of 8, then to the full height
    (a block dim equal to the full array dim is always legal)."""
    for mult in (16, 8):
        best = None
        t = mult
        while t <= min(ho, cap):
            if ho % t == 0:
                best = t
            t += mult
        if best is not None:
            return best
    return ho


def transit_forward(x, weight, gamma, beta, running_mean, running_var, *,
                    padding=0, eps=1e-5, out_dtype=None,
                    packed_input=False, packed_output=False):
    """Transit.forward (inference): conv3x3 (stride 1, no bias) -> BN -> ReLU.

    Default I/O matches PyTorch: x (N, Cin, H, W) -> (N, Cout, Ho, Wo) with
    Ho = H + 2p - 2, Wo = W + 2p - 2.  With packed_input / packed_output the
    activation stays in the lane-dense (N, H, W*C) layout so consecutive
    Transit layers skip the NCHW<->packed transposes (they otherwise dominate
    HBM traffic around this memory-bound kernel).
    """
    cout, cin = weight.shape[0], weight.shape[1]
    if packed_input:
        n, h, wcin_in = x.shape
        w = wcin_in // cin
        assert wcin_in == w * cin, "packed input width not a multiple of Cin"
    else:
        n, cin_x, h, w = x.shape
        assert cin_x == cin, "input channel mismatch"

    hp = h + 2 * padding                   # logical padded height
    ho = hp - 2
    wo = w + 2 * padding - 2
    assert ho >= 1 and wo >= 1, "image too small for a 3x3 valid conv"

    wc_in = w * cin                        # input-row lane width  (w, ci) packed
    wc_out = wo * cout                     # output-row lane width (wo, co) packed
    wc_out_pad = ((wc_out + 127) // 128) * 128   # lane-dense stores / full MXU N

    out_dtype = x.dtype if out_dtype is None else out_dtype

    # ---- fold BatchNorm (inference / running stats) into scale & bias ----
    scale = gamma / jnp.sqrt(running_var + eps)              # (Cout,)
    bias = beta - running_mean * scale                       # (Cout,)

    # ---- block-Toeplitz conv matrices, one per ky ------------------------
    # B[ky, w'*Cin + ci, wo*Cout + co] = scale[co] * weight[co, ci, ky, kx]
    #   with kx = w' + padding - wo  (zero outside 0 <= kx <= 2),
    # i.e. kx taps, channel mixing, BN scale, W zero-padding and the lane
    # padding are all folded into a single lane-dense matmul operand.
    w_taps = jnp.transpose(weight, (2, 3, 1, 0)) * scale[None, None, None, :]
    kx = jnp.arange(w)[:, None] + padding - jnp.arange(wo)[None, :]   # (W, Wo)
    valid = (kx >= 0) & (kx <= 2)
    b_mat = w_taps[:, jnp.clip(kx, 0, 2), :, :]              # (3, W, Wo, Cin, Cout)
    b_mat = jnp.where(valid[None, :, :, None, None], b_mat, 0.0)
    b_mat = jnp.transpose(b_mat, (0, 1, 3, 2, 4)).reshape(3, wc_in, wc_out)
    b_mat = jnp.pad(b_mat, ((0, 0), (0, 0), (0, wc_out_pad - wc_out)))
    b_mat = b_mat.astype(jnp.bfloat16)                       # MXU-friendly

    # BN bias tiled over output columns (zero in padded lanes) -> lane-dense add.
    bias_tiled = jnp.pad(jnp.tile(bias.astype(jnp.float32), wo),
                         (0, wc_out_pad - wc_out)).reshape(1, wc_out_pad)

    # ---- input rows: (N, Hp_pad, W*Cin) bf16, H zero-padded ---------------
    # (W padding lives inside b_mat, so only H is padded here; bf16 cast is
    #  done BEFORE the transpose to halve the relayout bytes.)
    hp_pad = ((hp + 7) // 8) * 8
    if packed_input:
        x_rows = x.astype(jnp.bfloat16)
    else:
        x_rows = jnp.transpose(x.astype(jnp.bfloat16), (0, 2, 3, 1))  # NHWC
        x_rows = x_rows.reshape(n, h, wc_in)
    x_rows = jnp.pad(x_rows, ((0, 0),
                              (padding, hp_pad - h - padding),
                              (0, 0)))

    th = _pick_row_tile(ho)
    grid = (n, ho // th)

    # ---- VMEM budget, derived from the actual (double-buffered) footprint --
    out_bytes = jnp.dtype(out_dtype).itemsize
    footprint = 2 * (hp_pad * wc_in * 2                      # input slab (bf16)
                     + 3 * wc_in * wc_out_pad * 2            # Toeplitz weights
                     + wc_out_pad * 4                        # bias
                     + th * wc_out_pad * out_bytes)          # output tile
    try:
        phys_vmem = int(pltpu.get_tpu_info().vmem_capacity_bytes)
    except Exception:   # conservative fallback = v7x per-core VMEM
        phys_vmem = 64 * 1024 * 1024
    vmem_limit = min(int(0.75 * phys_vmem),
                     max(footprint + (8 << 20), 32 << 20))

    out_rows = pl.pallas_call(
        _transit_kernel,
        out_shape=jax.ShapeDtypeStruct((n, ho, wc_out_pad), out_dtype),
        grid_spec=pltpu.PrefetchScalarGridSpec(
            num_scalar_prefetch=0,
            grid=grid,
            in_specs=[
                # Whole (H-padded) image of one batch element stays resident
                # in VMEM while its row tiles are processed (block index does
                # not change along the row axis -> DMA'd once per batch elem);
                # the TH+2-row halo per tile is a pl.ds slice in the kernel.
                pl.BlockSpec((1, hp_pad, wc_in), lambda b, i: (b, 0, 0)),
                pl.BlockSpec((3, wc_in, wc_out_pad), lambda b, i: (0, 0, 0)),
                pl.BlockSpec((1, wc_out_pad), lambda b, i: (0, 0)),
            ],
            out_specs=pl.BlockSpec((1, th, wc_out_pad), lambda b, i: (b, i, 0)),
        ),
        compiler_params=pltpu.CompilerParams(
            dimension_semantics=("parallel", "parallel"),
            vmem_limit_bytes=vmem_limit,
        ),
    )(x_rows, b_mat, bias_tiled)

    out_rows = out_rows[:, :, :wc_out]                       # drop lane padding
    if packed_output:
        return out_rows                                      # (N, Ho, Wo*Cout)
    # (N, Ho, Wo*Cout) -> (N, Cout, Ho, Wo), matching the PyTorch contract.
    return jnp.transpose(out_rows.reshape(n, ho, wo, cout), (0, 3, 1, 2))


if __name__ == "__main__":
    key = jax.random.PRNGKey(0)
    k_x, k_w, k_g, k_b, k_m, k_v = jax.random.split(key, 6)

    N, Cin, H, W = 2, 4, 16, 16
    Cout = 8
    padding = 1
    eps = 1e-5

    x = jax.random.normal(k_x, (N, Cin, H, W), dtype=jnp.float32)
    weight = jax.random.normal(k_w, (Cout, Cin, 3, 3), dtype=jnp.float32) * 0.1
    gamma = jax.random.normal(k_g, (Cout,), dtype=jnp.float32) * 0.1 + 1.0
    beta = jax.random.normal(k_b, (Cout,), dtype=jnp.float32) * 0.1
    running_mean = jax.random.normal(k_m, (Cout,), dtype=jnp.float32) * 0.1
    running_var = jax.random.uniform(k_v, (Cout,), dtype=jnp.float32,
                                     minval=0.5, maxval=1.5)

    fwd = jax.jit(functools.partial(transit_forward, padding=padding, eps=eps))
    out = fwd(x, weight, gamma, beta, running_mean, running_var)
    jax.block_until_ready(out)

    # ---- reference checks -------------------------------------------------
    scale = gamma / jnp.sqrt(running_var + eps)
    bias = beta - running_mean * scale

    # (1) same-precision reference (bf16-rounded inputs & folded weights,
    #     f32 accumulation) -> tight tolerance.
    xq = x.astype(jnp.bfloat16).astype(jnp.float32)
    wq = (weight * scale[:, None, None, None]).astype(jnp.bfloat16).astype(jnp.float32)
    ref_q = jax.lax.conv_general_dilated(
        xq, wq, window_strides=(1, 1),
        padding=[(padding, padding), (padding, padding)],
        dimension_numbers=("NCHW", "OIHW", "NCHW"))
    ref_q = jnp.maximum(ref_q + bias[None, :, None, None], 0.0)

    # (2) full-f32 PyTorch-semantics reference -> loose tolerance (bf16 inputs).
    ref_f = jax.lax.conv_general_dilated(
        x, weight, window_strides=(1, 1),
        padding=[(padding, padding), (padding, padding)],
        dimension_numbers=("NCHW", "OIHW", "NCHW"))
    ref_f = jnp.maximum(ref_f * scale[None, :, None, None]
                        + bias[None, :, None, None], 0.0)

    assert out.shape == ref_f.shape
    assert jnp.allclose(out, ref_q, atol=2e-3, rtol=2e-3)
    assert jnp.allclose(out, ref_f, atol=5e-2, rtol=5e-2)

    print("KERNEL_OK")
</pallas_src>

<mosaic_0001>
module attributes {stable_mosaic.version = 11 : i64} {
  func.func @_transit_kernel(%arg0: i32, %arg1: i32, %arg2: memref<1x24x64xbf16, #tpu.memory_space<vmem>>, %arg3: memref<3x64x128xbf16, #tpu.memory_space<vmem>>, %arg4: memref<1x128xf32, #tpu.memory_space<vmem>>, %arg5: memref<1x16x128xf32, #tpu.memory_space<vmem>>) attributes {dimension_semantics = [#tpu.dimension_semantics<parallel>, #tpu.dimension_semantics<parallel>], iteration_bounds = array<i64: 2, 1>, scalar_prefetch = 0 : i64, scratch_operands = 0 : i64, tpu.core_type = #tpu.core_type<tc>, window_params = [{transform_indices = @transform_0, window_bounds = array<i64: 1, 24, 64>}, {pipeline_mode = #tpu.pipeline_mode<synchronous>, transform_indices = @transform_1, window_bounds = array<i64: 3, 64, 128>}, {pipeline_mode = #tpu.pipeline_mode<synchronous>, transform_indices = @transform_2, window_bounds = array<i64: 1, 128>}, {transform_indices = @transform_3, window_bounds = array<i64: 1, 16, 128>}]} {
    %c16_i32 = arith.constant 16 : i32
    %0 = arith.muli %arg1, %c16_i32 : i32
    %1 = tpu.assume_multiple %0, 16 : i32
    %c0 = arith.constant 0 : index
    %2 = arith.index_cast %1 : i32 to index
    %c0_0 = arith.constant 0 : index
    %3 = vector.load %arg2[%c0, %2, %c0_0] : memref<1x24x64xbf16, #tpu.memory_space<vmem>>, vector<1x18x64xbf16>
    %4 = vector.shape_cast %3 : vector<1x18x64xbf16> to vector<18x64xbf16>
    %cst = arith.constant 0.000000e+00 : f32
    %5 = vector.broadcast %cst : f32 to vector<16x128xf32>
    %6 = vector.extract_strided_slice %4 {offsets = [0, 0], sizes = [16, 64], strides = [1, 1]} : vector<18x64xbf16> to vector<16x64xbf16>
    %c0_1 = arith.constant 0 : index
    %c0_2 = arith.constant 0 : index
    %c0_3 = arith.constant 0 : index
    %7 = vector.load %arg3[%c0_1, %c0_2, %c0_3] : memref<3x64x128xbf16, #tpu.memory_space<vmem>>, vector<1x64x128xbf16>
    %8 = vector.shape_cast %7 : vector<1x64x128xbf16> to vector<64x128xbf16>
    %cst_4 = arith.constant dense<0.000000e+00> : vector<16x128xf32>
    %9 = tpu.matmul %6, %8, %cst_4 {dimension_numbers = #tpu.dot_dimension_numbers<[1], [0], [0], [1], [0, 0, 1, 1], [], []>} : vector<16x64xbf16>, vector<64x128xbf16>, vector<16x128xf32> -> vector<16x128xf32>
    %10 = arith.addf %5, %9 : vector<16x128xf32>
    %11 = vector.extract_strided_slice %4 {offsets = [1, 0], sizes = [16, 64], strides = [1, 1]} : vector<18x64xbf16> to vector<16x64xbf16>
    %c1 = arith.constant 1 : index
    %c0_5 = arith.constant 0 : index
    %c0_6 = arith.constant 0 : index
    %12 = vector.load %arg3[%c1, %c0_5, %c0_6] : memref<3x64x128xbf16, #tpu.memory_space<vmem>>, vector<1x64x128xbf16>
    %13 = vector.shape_cast %12 : vector<1x64x128xbf16> to vector<64x128xbf16>
    %cst_7 = arith.constant dense<0.000000e+00> : vector<16x128xf32>
    %14 = tpu.matmul %11, %13, %cst_7 {dimension_numbers = #tpu.dot_dimension_numbers<[1], [0], [0], [1], [0, 0, 1, 1], [], []>} : vector<16x64xbf16>, vector<64x128xbf16>, vector<16x128xf32> -> vector<16x128xf32>
    %15 = arith.addf %10, %14 : vector<16x128xf32>
    %16 = vector.extract_strided_slice %4 {offsets = [2, 0], sizes = [16, 64], strides = [1, 1]} : vector<18x64xbf16> to vector<16x64xbf16>
    %c2 = arith.constant 2 : index
    %c0_8 = arith.constant 0 : index
    %c0_9 = arith.constant 0 : index
    %17 = vector.load %arg3[%c2, %c0_8, %c0_9] : memref<3x64x128xbf16, #tpu.memory_space<vmem>>, vector<1x64x128xbf16>
    %18 = vector.shape_cast %17 : vector<1x64x128xbf16> to vector<64x128xbf16>
    %cst_10 = arith.constant dense<0.000000e+00> : vector<16x128xf32>
    %19 = tpu.matmul %16, %18, %cst_10 {dimension_numbers = #tpu.dot_dimension_numbers<[1], [0], [0], [1], [0, 0, 1, 1], [], []>} : vector<16x64xbf16>, vector<64x128xbf16>, vector<16x128xf32> -> vector<16x128xf32>
    %20 = arith.addf %15, %19 : vector<16x128xf32>
    %c0_11 = arith.constant 0 : index
    %c0_12 = arith.constant 0 : index
    %21 = vector.load %arg4[%c0_11, %c0_12] : memref<1x128xf32, #tpu.memory_space<vmem>>, vector<1x128xf32>
    %22 = vector.broadcast %21 : vector<1x128xf32> to vector<16x128xf32>
    %23 = arith.addf %20, %22 : vector<16x128xf32>
    %cst_13 = arith.constant 0.000000e+00 : f32
    %24 = vector.broadcast %cst_13 : f32 to vector<16x128xf32>
    %25 = arith.maximumf %23, %24 : vector<16x128xf32>
    %c0_14 = arith.constant 0 : index
    %c0_15 = arith.constant 0 : index
    %c0_16 = arith.constant 0 : index
    %26 = vector.load %arg5[%c0_14, %c0_15, %c0_16] : memref<1x16x128xf32, #tpu.memory_space<vmem>>, vector<1x16x128xf32>
    %27 = vector.shape_cast %26 : vector<1x16x128xf32> to vector<16x128xf32>
    %28 = vector.shape_cast %25 : vector<16x128xf32> to vector<1x16x128xf32>
    tpu.vector_store %arg5[%c0_14, %c0_15, %c0_16], %28 {strides = array<i32>} : memref<1x16x128xf32, #tpu.memory_space<vmem>>, vector<1x16x128xf32>,
    return
  }
  func.func @transform_0(%arg0: i32, %arg1: i32) -> (i32, i32, i32) {
    %c0_i32 = arith.constant 0 : i32
    %c0_i32_0 = arith.constant 0 : i32
    %c0_i32_1 = arith.constant 0 : i32
    return %arg0, %c0_i32, %c0_i32_0 : i32, i32, i32
  }
  func.func @transform_1(%arg0: i32, %arg1: i32) -> (i32, i32, i32) {
    %c0_i32 = arith.constant 0 : i32
    %c0_i32_0 = arith.constant 0 : i32
    %c0_i32_1 = arith.constant 0 : i32
    %c0_i32_2 = arith.constant 0 : i32
    return %c0_i32, %c0_i32_0, %c0_i32_1 : i32, i32, i32
  }
  func.func @transform_2(%arg0: i32, %arg1: i32) -> (i32, i32) {
    %c0_i32 = arith.constant 0 : i32
    %c0_i32_0 = arith.constant 0 : i32
    %c0_i32_1 = arith.constant 0 : i32
    return %c0_i32, %c0_i32_0 : i32, i32
  }
  func.func @transform_3(%arg0: i32, %arg1: i32) -> (i32, i32, i32) {
    %c0_i32 = arith.constant 0 : i32
    %c0_i32_0 = arith.constant 0 : i32
    return %arg0, %arg1, %c0_i32 : i32, i32, i32
  }
}

</mosaic_0001>

<llo_original>
// kernel: tile.8
$region0: #{tile.8}
  #allocation0 [shape = 's32[1]{0}', space=sflag, size = 0x4, scoped, tag = 'scoped memory for tile.8']
  %s0 = inlined_call_operand.vmem [shape: f32[8], index: 0, kind: input, shape index: {}]
  %s1 = inlined_call_operand.vmem [shape: f32[16,8], index: 1, kind: output, shape index: {}]
  // Predicated region
  $region2: #{tile.8} parent=0 // pred_check
    _
  $region3: #{tile.8} parent=0 // pred_check_branch
    %3 = sbr.rel (0) target = $region5
  $region4: #{tile.8} parent=0 // pred_region
    _
  $region5: #{tile.8} parent=0 // pred_fallthru
    _
  %v4 = vld [vmem:[%s0] ss:$0 sm:$0xff]
  %5 = vst [vmem:[%s1] sm:$0xff] %v4
  %s6 = scalar_lea.vmem %s1, 8
  %7 = vst [vmem:[%s6] sm:$0xff] %v4

// kernel: transit_forward.1
$region0: #{transit_forward.1}
  #allocation0 [shape = 'u32[]', space=smem, size = 0x4, offset = 0x4, fixed_abs, tag = 'smem constant byte address 0x4 - core index']
  #allocation1 [shape = 'u32[144,128]{1,0:T(1,128)}', space=vmem, size = 0x12000, scoped, tag = 'internal scratch']
  %s0 = inlined_call_operand.vmem [shape: bf16[2,24,64], index: 0, kind: input, shape index: {}]
  %s1 = inlined_call_operand.vmem [shape: bf16[3,64,128], index: 1, kind: input, shape index: {}]
  %s2 = inlined_call_operand.vmem [shape: f32[1,128], index: 2, kind: input, shape index: {}]
  %s3 = inlined_call_operand.vmem [shape: f32[2,16,128], index: 3, kind: output, shape index: {}]
  %s4 = sld [smem:[#allocation0]]
  $region45: #{transit_forward.1} parent=0
    _
  %s6 = ssub.s32 1, %s4
  %s7 = scalar_select 0, %s6, %s4
  loop: start=0, step=1, limit=4
  $region2: #{transit_forward.1} parent=0 // loop_pre_header
    _
  $region3: #{transit_forward.1} parent=0 // loop_header
    %s9 = sphi 0, %s13
    %p10 = scmp.ge.s32.totalorder %s9, 4
    %s16 = sphi 0, %s28
    %s17 = sphi 0, %s24
    %s18 = sphi 0, %s16
    %s19 = sphi 0, %s17
    %s20 = sphi 0, %s18
    %s21 = sphi 0, %s19
    %s31 = sphi 0, %s33
    %s34 = sphi 0, %s31
    %s35 = sphi 0, %s34
    %s51 = sphi 0, %s35
    %s55 = sphi 0, %s55
    %s57 = sphi 0, %s55
    %s58 = sphi 0, %s57
    %s72 = sphi 0, %s58
    %s76 = sphi 0, %s76
    %s78 = sphi 0, %s76
    %s79 = sphi 0, %s78
    %s93 = sphi 0, %s79
    %s101 = sphi 0, %s103
    %s104 = sphi 0, %s101
    %s105 = sphi 0, %s104
    %s121 = sphi 0, %s105
  $region4: #{transit_forward.1} parent=0 // loop_header_branch
    %12 = sbr.rel (%p10) target = $region8
  $region5: #{transit_forward.1} parent=0 // loop_body
    %s14 = ssub.s32 %s9, 1
    %s15 = ssub.s32 %s9, 2
    %s22 = sadd.s32 1, %s17
    %p23 = scmp.ge.s32.totalorder %s22, 1
    %s24 = scalar_select %p23, 0, %s22
    %s25 = sadd.s32 1, %s16
    %s26 = scalar_select %p23, %s25, %s16
    %p27 = scmp.ge.s32.totalorder %s26, 2
    %s28 = scalar_select %p27, 0, %s26
    %s29 = ssub.s32 %s16, %s28
    %p30 = scmp.eq.s32.totalorder %s29, 0
    %s32 = sadd.s32 %s31, 1
    %s33 = scalar_select %p30, %s31, %s32
    %p36 = pneg %p30
    %p37 = scmp.eq.s32.totalorder %s9, 1
    %p38 = por %p36, %p37
    %p39 = scmp.ne.s32.totalorder %s31, %s34
    %p40 = scmp.eq.s32.totalorder %s9, 0
    %p41 = por %p39, %p40
    %p42 = scmp.ne.s32.totalorder %s31, %s34
    %p43 = scmp.eq.s32.totalorder %s14, 1
    %p44 = por %p42, %p43
    %p45 = scmp.ne.s32.totalorder %s34, %s35
    %p46 = scmp.eq.s32.totalorder %s14, 0
    %p47 = por %p45, %p46
    %p48 = scmp.ne.s32.totalorder %s34, %s35
    %p49 = scmp.eq.s32.totalorder %s15, 1
    %p50 = por %p48, %p49
    %p52 = scmp.ne.s32.totalorder %s35, %s51
    %p53 = scmp.eq.s32.totalorder %s15, 0
    %p54 = por %p52, %p53
    %s56 = sadd.s32 %s55, 1
    %p59 = scmp.eq.s32.totalorder %s9, 1
    %p60 = scmp.ne.s32.totalorder %s55, %s57
    %p61 = scmp.eq.s32.totalorder %s9, 0
    %p62 = por %p60, %p61
    %p63 = scmp.ne.s32.totalorder %s55, %s57
    %p64 = scmp.eq.s32.totalorder %s14, 1
    %p65 = por %p63, %p64
    %p66 = scmp.ne.s32.totalorder %s57, %s58
    %p67 = scmp.eq.s32.totalorder %s14, 0
    %p68 = por %p66, %p67
    %p69 = scmp.ne.s32.totalorder %s57, %s58
    %p70 = scmp.eq.s32.totalorder %s15, 1
    %p71 = por %p69, %p70
    %p73 = scmp.ne.s32.totalorder %s58, %s72
    %p74 = scmp.eq.s32.totalorder %s15, 0
    %p75 = por %p73, %p74
    %s77 = sadd.s32 %s76, 1
    %p80 = scmp.eq.s32.totalorder %s9, 1
    %p81 = scmp.ne.s32.totalorder %s76, %s78
    %p82 = scmp.eq.s32.totalorder %s9, 0
    %p83 = por %p81, %p82
    %p84 = scmp.ne.s32.totalorder %s76, %s78
    %p85 = scmp.eq.s32.totalorder %s14, 1
    %p86 = por %p84, %p85
    %p87 = scmp.ne.s32.totalorder %s78, %s79
    %p88 = scmp.eq.s32.totalorder %s14, 0
    %p89 = por %p87, %p88
    %p90 = scmp.ne.s32.totalorder %s78, %s79
    %p91 = scmp.eq.s32.totalorder %s15, 1
    %p92 = por %p90, %p91
    %p94 = scmp.ne.s32.totalorder %s79, %s93
    %p95 = scmp.eq.s32.totalorder %s15, 0
    %p96 = por %p94, %p95
    %s97 = ssub.s32 %s16, %s28
    %s98 = ssub.s32 %s17, %s24
    %s99 = sor.u32 %s97, %s98
    %p100 = scmp.eq.s32.totalorder %s99, 0
    %s102 = sadd.s32 %s101, 1
    %s103 = scalar_select %p100, %s101, %s102
    %p106 = pneg %p100
    %p107 = scmp.eq.s32.totalorder %s9, 1
    %p108 = por %p106, %p107
    %p109 = scmp.ne.s32.totalorder %s101, %s104
    %p110 = scmp.eq.s32.totalorder %s9, 0
    %p111 = por %p109, %p110
    %p112 = scmp.ne.s32.totalorder %s101, %s104
    %p113 = scmp.eq.s32.totalorder %s14, 1
    %p114 = por %p112, %p113
    %p115 = scmp.ne.s32.totalorder %s104, %s105
    %p116 = scmp.eq.s32.totalorder %s14, 0
    %p117 = por %p115, %p116
    %p118 = scmp.ne.s32.totalorder %s104, %s105
    %p119 = scmp.eq.s32.totalorder %s15, 1
    %p120 = por %p118, %p119
    %p122 = scmp.ne.s32.totalorder %s105, %s121
    %p123 = scmp.eq.s32.totalorder %s15, 0
    %p124 = por %p122, %p123
    %p125 = scmp.le.s32.totalorder 1, %s9
    %p126 = scmp.lt.s32.totalorder %s9, 3
    %p127 = pnand %p125, %p126
    %p128 = pneg %p127
    // Predicated region
    $region9: #{transit_forward.1} parent=5 // pred_check
      _
    $region10: #{transit_forward.1} parent=5 // pred_check_branch
      %130 = sbr.rel (%p127) target = $region12
    $region11: #{transit_forward.1} parent=5 // pred_region
      %s131 = ssub.s32 %s9, 1
      // Predicated region
      $region13: #{transit_forward.1} parent=11 // pred_check
        %p132 = pneg %p68
      $region14: #{transit_forward.1} parent=11 // pred_check_branch
        %134 = sbr.rel (%p132) target = $region16
      $region15: #{transit_forward.1} parent=11 // pred_region
        _
      $region16: #{transit_forward.1} parent=11 // pred_fallthru
        _
      // Predicated region
      $region17: #{transit_forward.1} parent=11 // pred_check
        %p135 = pneg %p89
      $region18: #{transit_forward.1} parent=11 // pred_check_branch
        %137 = sbr.rel (%p135) target = $region20
      $region19: #{transit_forward.1} parent=11 // pred_region
        _
      $region20: #{transit_forward.1} parent=11 // pred_fallthru
        _
    $region12: #{transit_forward.1} parent=5 // pred_fallthru
      _
    %p138 = scmp.lt.s32.totalorder %s9, 2
    // Predicated region
    $region21: #{transit_forward.1} parent=5 // pred_check
      %p139 = pneg %p138
    $region22: #{transit_forward.1} parent=5 // pred_check_branch
      %141 = sbr.rel (%p139) target = $region24
    $region23: #{transit_forward.1} parent=5 // pred_region
      // Predicated region
      $region25: #{transit_forward.1} parent=23 // pred_check
        %p142 = pneg %p41
      $region26: #{transit_forward.1} parent=23 // pred_check_branch
        %144 = sbr.rel (%p142) target = $region28
      $region27: #{transit_forward.1} parent=23 // pred_region
        %p145 = scmp.lt.s32.totalorder %s16, 1
        %s146 = scalar_select %p145, %s16, 1
        %s147 = smul.addr %s146, 3
        %s148 = smul.addr %s147, 4
        %s149 = scalar_lea.vmem %s0, %s148
      $region28: #{transit_forward.1} parent=23 // pred_fallthru
        _
    $region24: #{transit_forward.1} parent=5 // pred_fallthru
      _
    %p150 = scmp.le.s32.totalorder 1, %s9
    %p151 = scmp.lt.s32.totalorder %s9, 3
    %p152 = pnand %p150, %p151
    %p153 = pneg %p152
    // Predicated region
    $region29: #{transit_forward.1} parent=5 // pred_check
      _
    $region30: #{transit_forward.1} parent=5 // pred_check_branch
      %155 = sbr.rel (%p152) target = $region32
    $region31: #{transit_forward.1} parent=5 // pred_region
      %s156 = ssub.s32 %s9, 1
      %p157 = scmp.lt.s32.totalorder %s18, 1
      %s158 = scalar_select %p157, %s18, 1
      %s159 = smul.addr %s158, 3
      %s160 = smul.addr %s159, 4
      %s161 = scalar_lea.vmem %s0, %s160
      %p162 = pneg %p47
      %p163 = pneg %p44
      %p164 = pneg %p68
      %p165 = pneg %p65
      %p166 = pneg %p89
      %p167 = pneg %p86
      %p168 = pneg %p117
      %p169 = pneg %p114
      %s170 = smul.u32 2, %s19
      %p171 = scmp.lt.s32.totalorder %s18, 1
      %s172 = scalar_select %p171, %s18, 1
      %p173 = scmp.lt.s32.totalorder %s170, 1
      %s174 = scalar_select %p173, %s170, 1
      %s175 = smul.addr %s172, 2
      %s176 = sadd.s32 %s174, %s175
      %s177 = smul.addr %s176, 8
      %s178 = scalar_lea.vmem %s3, %s177
      %p179 = scmp.lt.s32.totalorder %s18, 1
      %s180 = scalar_select %p179, %s18, 1
      %s181 = smul.addr %s180, 3
      %s182 = smul.addr %s181, 4
      %s183 = scalar_lea.vmem %s0, %s182
      %s184 = smul.u32 2, %s19
      %p185 = scmp.lt.s32.totalorder %s18, 1
      %s186 = scalar_select %p185, %s18, 1
      %p187 = scmp.lt.s32.totalorder %s184, 1
      %s188 = scalar_select %p187, %s184, 1
      %s189 = smul.addr %s186, 2
      %s190 = sadd.s32 %s188, %s189
      %s191 = smul.addr %s190, 8
      %s192 = scalar_lea.vmem %s3, %s191
      %s193 = smul.u32 2, %s19
      %s195 = smul.u32 %s19, 16
      %s196 = sshra.s32 %s195, 3
      %s197 = sand.u32 %s195, 7
      %s198 = smul.addr %s196, 4
      %s199 = scalar_lea.vmem %s183, %s198
      %v200 = vld [vmem:[%s199] sm:$0xf]
      %v201 = vld [vmem:[%s199 + $0x4] sm:$0xf]
      %v202 = vld [vmem:[%s199 + $0x8] sm:$0x1]
      %v203 = vld [vmem:[%s1] sm:$0xf]
      %v204 = vld [vmem:[%s1 + $0x4] sm:$0xf]
      %v205 = vld [vmem:[%s1 + $0x8] sm:$0xf]
      %v206 = vld [vmem:[%s1 + $0xc] sm:$0xf]
      %v207 = vld [vmem:[%s1 + $0x10] sm:$0xf]
      %v208 = vld [vmem:[%s1 + $0x14] sm:$0xf]
      %v209 = vld [vmem:[%s1 + $0x18] sm:$0xf]
      %v210 = vld [vmem:[%s1 + $0x1c] sm:$0xf]
      %s211 = scalar_lea.vmem %s1, 32
      %v212 = vld [vmem:[%s211] sm:$0xf]
      %v213 = vld [vmem:[%s211 + $0x4] sm:$0xf]
      %v214 = vld [vmem:[%s211 + $0x8] sm:$0xf]
      %v215 = vld [vmem:[%s211 + $0xc] sm:$0xf]
      %v216 = vld [vmem:[%s211 + $0x10] sm:$0xf]
      %v217 = vld [vmem:[%s211 + $0x14] sm:$0xf]
      %v218 = vld [vmem:[%s211 + $0x18] sm:$0xf]
      %v219 = vld [vmem:[%s211 + $0x1c] sm:$0xf]
      %v223 = vunpack.c.l.b16 %v200
      %v224 = vunpack.c.l.b16 %v201
      %v225 = vunpack.c.l.b16 %v202
      %v226 = vpack.c.b16 %v224, %v223
      %v227 = vpack.c.b16 %v225, %v225
      %vm228 = vsmask.f32 7424
      %v230 = vshrl.u32 %v226, 16
      %v232 = vshll.u32 %v226, 16
      %v234 = vrot.slane %v232, 1
      %v235 = vor.u32 %v230, %v234
      %v237 = vshll.u32 %v227, 16
      %v239 = vrot.slane %v237, 1
      %v240 = vsel %vm228, %v235, %v239
      %v249 = vunpack.c.l.b16 %v212
      %v250 = vunpack.c.l.b16 %v213
      %v251 = vunpack.c.l.b16 %v214
      %v252 = vunpack.c.l.b16 %v215
      %v253 = vunpack.c.l.b16 %v216
      %v254 = vunpack.c.l.b16 %v217
      %v255 = vunpack.c.l.b16 %v218
      %v256 = vunpack.c.l.b16 %v219
      %v257 = vpack.c.b16 %v250, %v249
      %v258 = vpack.c.b16 %v252, %v251
      %v259 = vpack.c.b16 %v254, %v253
      %v260 = vpack.c.b16 %v256, %v255
      %vm265 = vcmask 523264
      %v267 = vsel %vm265, %v240, 0
      %269 = vmatprep.subr.bf16.mxu0 0
      %270 = vmatpush1.bf16.msra.mxu0 %v257
      %271 = vmatprep.subr.bf16.mxu0 0
      %272 = vmatpush1.bf16.msra.mxu0 %v258
      %273 = vmatprep.subr.bf16.mxu0 0
      %274 = vmatpush1.bf16.msra.mxu0 %v259
      %275 = vmatprep.subr.bf16.mxu0 0
      %276 = vmatpush1.bf16.msra.mxu0 %v260
      %277 = vmatprep.subr.bf16.mxu0 0
      %278 = vmatpush1.bf16.msra.mxu0 0
      %279 = vmatprep.subr.bf16.mxu0 0
      %280 = vmatpush1.bf16.msra.mxu0 0
      %281 = vmatprep.subr.bf16.mxu0 0
      %282 = vmatpush1.bf16.msra.mxu0 0
      %283 = vmatprep.subr.bf16.mxu0 0
      %284 = vmatpush1.bf16.msra.mxu0 0
      %285 = vmatprep.subr.bf16.mxu0 0
      %286 = vmatpush1.bf16.msra.mxu0 0
      %287 = vmatprep.subr.bf16.mxu0 0
      %288 = vmatpush1.bf16.msra.mxu0 0
      %289 = vmatprep.subr.bf16.mxu0 0
      %290 = vmatpush1.bf16.msra.mxu0 0
      %291 = vmatprep.subr.bf16.mxu0 0
      %292 = vmatpush1.bf16.msra.mxu0 0
      %293 = vmatprep.subr.bf16.mxu0 0
      %294 = vmatpush1.bf16.msra.mxu0 0
      %295 = vmatprep.subr.bf16.mxu0 0
      %296 = vmatpush1.bf16.msra.mxu0 0
      %297 = vmatprep.subr.bf16.mxu0 0
      %298 = vmatpush1.bf16.msra.mxu0 0
      %299 = vmatprep.subr.bf16.mxu0 0
      %300 = vmatpush1.bf16.msra.mxu0 0
      %301 = vmatprep.mubr.bf16.mxu0 0
      %302 = vmatmul.mubr.bf16.gmra.mrb[0].mxu0 %v267
      %v303 = vpop.f32.mrb[0].mxu0
      %v304 = vadd.f32 0.0, %v303
      %v305 = vpop.f32.mrb[0].mxu0
      %v306 = vpop.f32.mrb[0].mxu0
      %v307 = vadd.f32 0.0, %v306
      %v308 = vpop.f32.mrb[0].mxu0
      %309 = vdwg.mxu0
      %v318 = vunpack.c.l.b16 %v203
      %v319 = vunpack.c.l.b16 %v204
      %v320 = vunpack.c.l.b16 %v205
      %v321 = vunpack.c.l.b16 %v206
      %v322 = vunpack.c.l.b16 %v207
      %v323 = vunpack.c.l.b16 %v208
      %v324 = vunpack.c.l.b16 %v209
      %v325 = vunpack.c.l.b16 %v210
      %v326 = vpack.c.b16 %v319, %v318
      %v327 = vpack.c.b16 %v321, %v320
      %v328 = vpack.c.b16 %v323, %v322
      %v329 = vpack.c.b16 %v325, %v324
      %v334 = vsel %vm265, %v226, 0
      %336 = vmatprep.subr.bf16.mxu0 0
      %337 = vmatpush1.bf16.msra.mxu0 %v326
      %338 = vmatprep.subr.bf16.mxu0 0
      %339 = vmatpush1.bf16.msra.mxu0 %v327
      %340 = vmatprep.subr.bf16.mxu0 0
      %341 = vmatpush1.bf16.msra.mxu0 %v328
      %342 = vmatprep.subr.bf16.mxu0 0
      %343 = vmatpush1.bf16.msra.mxu0 %v329
      %344 = vmatprep.subr.bf16.mxu0 0
      %345 = vmatpush1.bf16.msra.mxu0 0
      %346 = vmatprep.subr.bf16.mxu0 0
      %347 = vmatpush1.bf16.msra.mxu0 0
      %348 = vmatprep.subr.bf16.mxu0 0
      %349 = vmatpush1.bf16.msra.mxu0 0
      %350 = vmatprep.subr.bf16.mxu0 0
      %351 = vmatpush1.bf16.msra.mxu0 0
      %352 = vmatprep.subr.bf16.mxu0 0
      %353 = vmatpush1.bf16.msra.mxu0 0
      %354 = vmatprep.subr.bf16.mxu0 0
      %355 = vmatpush1.bf16.msra.mxu0 0
      %356 = vmatprep.subr.bf16.mxu0 0
      %357 = vmatpush1.bf16.msra.mxu0 0
      %358 = vmatprep.subr.bf16.mxu0 0
      %359 = vmatpush1.bf16.msra.mxu0 0
      %360 = vmatprep.subr.bf16.mxu0 0
      %361 = vmatpush1.bf16.msra.mxu0 0
      %362 = vmatprep.subr.bf16.mxu0 0
      %363 = vmatpush1.bf16.msra.mxu0 0
      %364 = vmatprep.subr.bf16.mxu0 0
      %365 = vmatpush1.bf16.msra.mxu0 0
      %366 = vmatprep.subr.bf16.mxu0 0
      %367 = vmatpush1.bf16.msra.mxu0 0
      %368 = vmatprep.mubr.bf16.mxu0 0
      %369 = vmatmul.mubr.bf16.gmra.mrb[0].mxu0 %v334
      %v370 = vpop.f32.mrb[0].mxu0
      %v371 = vadd.f32 %v304, %v370
      %v372 = vpop.f32.mrb[0].mxu0
      %v373 = vpop.f32.mrb[0].mxu0
      %v374 = vadd.f32 %v307, %v373
      %v375 = vpop.f32.mrb[0].mxu0
      %376 = vdwg.mxu0
      %s377 = scalar_lea.vmem %s1, 64
      %v378 = vld [vmem:[%s377] sm:$0xf]
      %v379 = vld [vmem:[%s377 + $0x4] sm:$0xf]
      %v380 = vld [vmem:[%s377 + $0x8] sm:$0xf]
      %v381 = vld [vmem:[%s377 + $0xc] sm:$0xf]
      %v382 = vld [vmem:[%s377 + $0x10] sm:$0xf]
      %v383 = vld [vmem:[%s377 + $0x14] sm:$0xf]
      %v384 = vld [vmem:[%s377 + $0x18] sm:$0xf]
      %v385 = vld [vmem:[%s377 + $0x1c] sm:$0xf]
      %vm386 = vcmask 1046528
      %v387 = vrot.slane %v226, 1
      %v388 = vrot.slane %v227, 1
      %v389 = vsel %vm386, %v387, %v388
      %v398 = vunpack.c.l.b16 %v378
      %v399 = vunpack.c.l.b16 %v379
      %v400 = vunpack.c.l.b16 %v380
      %v401 = vunpack.c.l.b16 %v381
      %v402 = vunpack.c.l.b16 %v382
      %v403 = vunpack.c.l.b16 %v383
      %v404 = vunpack.c.l.b16 %v384
      %v405 = vunpack.c.l.b16 %v385
      %v406 = vpack.c.b16 %v399, %v398
      %v407 = vpack.c.b16 %v401, %v400
      %v408 = vpack.c.b16 %v403, %v402
      %v409 = vpack.c.b16 %v405, %v404
      %v415 = vsel %vm265, %v389, 0
      %417 = vmatprep.subr.bf16.mxu0 0
      %418 = vmatpush1.bf16.msra.mxu0 %v406
      %419 = vmatprep.subr.bf16.mxu0 0
      %420 = vmatpush1.bf16.msra.mxu0 %v407
      %421 = vmatprep.subr.bf16.mxu0 0
      %422 = vmatpush1.bf16.msra.mxu0 %v408
      %423 = vmatprep.subr.bf16.mxu0 0
      %424 = vmatpush1.bf16.msra.mxu0 %v409
      %425 = vmatprep.subr.bf16.mxu0 0
      %426 = vmatpush1.bf16.msra.mxu0 0
      %427 = vmatprep.subr.bf16.mxu0 0
      %428 = vmatpush1.bf16.msra.mxu0 0
      %429 = vmatprep.subr.bf16.mxu0 0
      %430 = vmatpush1.bf16.msra.mxu0 0
      %431 = vmatprep.subr.bf16.mxu0 0
      %432 = vmatpush1.bf16.msra.mxu0 0
      %433 = vmatprep.subr.bf16.mxu0 0
      %434 = vmatpush1.bf16.msra.mxu0 0
      %435 = vmatprep.subr.bf16.mxu0 0
      %436 = vmatpush1.bf16.msra.mxu0 0
      %437 = vmatprep.subr.bf16.mxu0 0
      %438 = vmatpush1.bf16.msra.mxu0 0
      %439 = vmatprep.subr.bf16.mxu0 0
      %440 = vmatpush1.bf16.msra.mxu0 0
      %441 = vmatprep.subr.bf16.mxu0 0
      %442 = vmatpush1.bf16.msra.mxu0 0
      %443 = vmatprep.subr.bf16.mxu0 0
      %444 = vmatpush1.bf16.msra.mxu0 0
      %445 = vmatprep.subr.bf16.mxu0 0
      %446 = vmatpush1.bf16.msra.mxu0 0
      %447 = vmatprep.subr.bf16.mxu0 0
      %448 = vmatpush1.bf16.msra.mxu0 0
      %449 = vmatprep.mubr.bf16.mxu0 0
      %450 = vmatmul.mubr.bf16.gmra.mrb[0].mxu0 %v415
      %v451 = vpop.f32.mrb[0].mxu0
      %v452 = vadd.f32 0.0, %v451
      %v453 = vpop.f32.mrb[0].mxu0
      %v454 = vpop.f32.mrb[0].mxu0
      %v455 = vadd.f32 0.0, %v454
      %v456 = vpop.f32.mrb[0].mxu0
      %457 = vdwg.mxu0
      %v458 = vadd.f32 %v371, %v452
      %v459 = vadd.f32 %v374, %v455
      %v460 = vld [vmem:[%s2] sm:$0x1]
      %v462 = vlaneseq
      %v463 = vshrl.u32 %v462, 7
      %v464 = vsub.s32 0, %v463
      %v465 = vrot.slane %v460, %v464
      %v467 = vadd.f32 %v458, %v465
      %v468 = vadd.f32 %v459, %v465
      %v469 = vmax.f32 %v467, 0.0
      %v470 = vmax.f32 %v468, 0.0
      %471 = vst [vmem:[%s192] sm:$0xff] %v469
      %472 = vst [vmem:[%s192 + $0x8] sm:$0xff] %v470
      %s473 = smul.u32 2, %s19
      %p474 = scmp.lt.s32.totalorder %s18, 1
      %s475 = scalar_select %p474, %s18, 1
      %p476 = scmp.lt.s32.totalorder %s473, 1
      %s477 = scalar_select %p476, %s473, 1
      %s478 = smul.addr %s475, 2
      %s479 = sadd.s32 %s477, %s478
      %s480 = smul.addr %s479, 8
      %s481 = scalar_lea.vmem %s3, %s480
      // Predicated region
      $region33: #{transit_forward.1} parent=31 // pred_check
        %p482 = pneg %p114
      $region34: #{transit_forward.1} parent=31 // pred_check_branch
        %484 = sbr.rel (%p482) target = $region36
      $region35: #{transit_forward.1} parent=31 // pred_region
        %s485 = smul.u32 2, %s19
      $region36: #{transit_forward.1} parent=31 // pred_fallthru
        _
    $region32: #{transit_forward.1} parent=5 // pred_fallthru
      _
    %p486 = scmp.le.s32.totalorder 2, %s9
    // Predicated region
    $region37: #{transit_forward.1} parent=5 // pred_check
      %p487 = pneg %p486
    $region38: #{transit_forward.1} parent=5 // pred_check_branch
      %489 = sbr.rel (%p487) target = $region40
    $region39: #{transit_forward.1} parent=5 // pred_region
      %s490 = ssub.s32 %s9, 2
      // Predicated region
      $region41: #{transit_forward.1} parent=39 // pred_check
        %p491 = pneg %p120
      $region42: #{transit_forward.1} parent=39 // pred_check_branch
        %493 = sbr.rel (%p491) target = $region44
      $region43: #{transit_forward.1} parent=39 // pred_region
        %s494 = smul.u32 2, %s21
        %p495 = scmp.lt.s32.totalorder %s20, 1
        %s496 = scalar_select %p495, %s20, 1
        %p497 = scmp.lt.s32.totalorder %s494, 1
        %s498 = scalar_select %p497, %s494, 1
        %s499 = smul.addr %s496, 2
        %s500 = sadd.s32 %s498, %s499
        %s501 = smul.addr %s500, 8
        %s502 = scalar_lea.vmem %s3, %s501
      $region44: #{transit_forward.1} parent=39 // pred_fallthru
        _
    $region40: #{transit_forward.1} parent=5 // pred_fallthru
      _
  $region6: #{transit_forward.1} parent=0 // loop_footer
    %s13 = sadd.s32 1, %s9
  $region7: #{transit_forward.1} parent=0 // loop_footer_branch
    %8 = sbr.rel target = $region3
  $region8: #{transit_forward.1} parent=0 // loop_exit
    _

</llo_original>
